<compile_context>
chip_gen: v5e
topology: v5e:2x2
jax: 0.10.0
libtpu: 0.0.40
codegen_flags: <defaults>
</compile_context>

<pallas_src>
import functools

import jax
import jax.numpy as jnp
from jax.experimental import pallas as pl
from jax.experimental.pallas import tpu as pltpu


def _dict_encoding_kernel(x_ref, cw_ref, cwt_ref, gamma_ref, out_ref, *,
                          mxu_dtype=None):
    # x_ref:   (D, TN) tile of X[b] in channel-major layout
    # cw_ref:  (D, K)  full codewords
    # cwt_ref: (K, D)  pre-transposed codewords (avoids in-kernel transpose)
    # gamma_ref: (1,)  scalar in SMEM
    x = x_ref[...]                                    # native dtype, no copy
    gamma = gamma_ref[0]

    if mxu_dtype is None:
        x_mm = x.astype(jnp.float32)
        cw_mm = cw_ref[...].astype(jnp.float32)
        cwt_mm = cwt_ref[...].astype(jnp.float32)
        approx = False
    else:
        # Feed the MXU in low precision; keep softmax / residual in f32.
        x_mm = x if x.dtype == mxu_dtype else x.astype(mxu_dtype)
        cw_mm = cw_ref[...].astype(mxu_dtype)
        cwt_mm = cwt_ref[...].astype(mxu_dtype)
        approx = True

    # S = cw^T @ X -> (K, TN); standard (K,D)x(D,TN) contraction, no transpose.
    s = jnp.dot(cwt_mm, x_mm, preferred_element_type=jnp.float32)

    # Numerically-stable softmax over K (axis 0) == F.softmax(dim=-1) in (N, K).
    s = s - jnp.max(s, axis=0, keepdims=True)
    p = jnp.exp(s)
    inv = pl.reciprocal(jnp.sum(p, axis=0, keepdims=True), approx=approx)
    a = p * inv                                       # (K, TN)

    # Y = cw @ A -> (D, TN); gamma-scaled residual, lane-dense store.
    y = jnp.dot(cw_mm, a.astype(cw_mm.dtype), preferred_element_type=jnp.float32)
    out_ref[...] = (x.astype(jnp.float32) + gamma * y).astype(out_ref.dtype)


def _vmem_capacity_bytes():
    """Physical VMEM on this chip; conservative fallback if unavailable."""
    try:
        return int(pltpu.get_tpu_info().vmem_capacity_bytes)
    except Exception:
        return 64 << 20          # v7x per-TC VMEM (smallest of the family)


def _pick_tile_n(n_pad, d, k, in_itemsize, out_itemsize, vmem_budget):
    """Largest TN (multiple of 128, divides n_pad) whose double-buffered
    in/out blocks *plus* live f32 temporaries fit in `vmem_budget`, capped so
    each batch gets >= ~4 pipeline steps."""
    # Per-N-column VMEM:
    #   blocks : 2 * D * in_itemsize + 2 * D * out_itemsize   (double-buffered)
    #   temps  : x_f32 (4D) + s/p/a (12K) + y (4D) + low-precision casts (~2D)
    per_col = 2 * d * (in_itemsize + out_itemsize) + 10 * d + 12 * k
    cap = max(128, (vmem_budget // per_col) // 128 * 128)
    # Keep >= ~4 N-steps per batch (but never below 512 lanes / one tile) so
    # first-fetch / last-writeback DMAs are hidden by the pipeline.
    target = max(512, (n_pad // 4 // 128) * 128)
    tn = min(n_pad, cap, target)
    tn = max(128, (tn // 128) * 128)
    while n_pad % tn:
        tn -= 128
    return tn


def dict_encoding_forward(x, codewords, gamma, *, mxu_dtype=None):
    """x: (B, D, H, W), codewords: (D, K), gamma: (1,)"""
    # TODO(synk): PyTorch's 3-D input branch is not supported (its residual
    # reshape is ill-defined for 3-D anyway); only NCHW 4-D inputs here.
    B, D, H, W = x.shape
    K = codewords.shape[1]
    N = H * W

    x3 = x.reshape(B, D, N)                      # free view, no HBM transpose
    # Pad N up to a multiple of 128 -> lane-dense stores, bounded tiles.
    n_pad = ((N + 127) // 128) * 128
    if n_pad != N:
        x3 = jnp.pad(x3, ((0, 0), (0, 0), (0, n_pad - N)))

    vmem_cap = _vmem_capacity_bytes()
    vmem_budget = vmem_cap // 2                  # ~64 MiB v5e/v6e, ~32 MiB v7x
    vmem_limit = (vmem_cap * 3) // 4

    TN = _pick_tile_n(n_pad, D, K,
                      in_itemsize=x.dtype.itemsize,
                      out_itemsize=x.dtype.itemsize,
                      vmem_budget=vmem_budget)
    grid = (B, n_pad // TN)

    cw_t = codewords.T                           # tiny (K, D), one-time cost

    kernel = functools.partial(_dict_encoding_kernel, mxu_dtype=mxu_dtype)

    out3 = pl.pallas_call(
        kernel,
        out_shape=jax.ShapeDtypeStruct((B, D, n_pad), x.dtype),
        grid=grid,
        in_specs=[
            # per-(batch, N-tile) input block; batch dim squeezed in-kernel
            pl.BlockSpec((pl.Squeezed(), D, TN), lambda b, n: (b, 0, n)),
            # full codewords (both orientations), resident across the grid
            pl.BlockSpec((D, K), lambda b, n: (0, 0)),
            pl.BlockSpec((K, D), lambda b, n: (0, 0)),
            # gamma scalar in SMEM
            pl.BlockSpec(memory_space=pltpu.SMEM),
        ],
        out_specs=pl.BlockSpec((pl.Squeezed(), D, TN), lambda b, n: (b, 0, n)),
        compiler_params=pltpu.CompilerParams(
            dimension_semantics=("parallel", "parallel"),
            vmem_limit_bytes=int(vmem_limit)),
    )(x3, codewords, cw_t, gamma)

    if n_pad != N:
        out3 = out3[:, :, :N]
    return out3.reshape(B, D, H, W)


def _reference(x, codewords, gamma):
    B, D, H, W = x.shape
    xt = jnp.transpose(x.reshape(B, D, -1), (0, 2, 1))
    a = jax.nn.softmax(jnp.einsum("bnd,dk->bnk", xt, codewords), axis=-1)
    y = jnp.einsum("bnk,kd->bnd", a, codewords.T)
    return x + gamma[0] * jnp.transpose(y, (0, 2, 1)).reshape(B, D, H, W)


if __name__ == "__main__":
    # Small shapes consistent with the module's forward
    B, D, K, H, W = 2, 32, 16, 16, 16

    key = jax.random.PRNGKey(0)
    k_x, k_cw = jax.random.split(key)

    # Parameter init mirrors dict_Encoding.__init__ / reset_params:
    #   codewords ~ U(-std1, std1), std1 = 1/sqrt(K*D);  gamma = zeros(1)
    std1 = 1.0 / (K * D) ** 0.5
    codewords = jax.random.uniform(
        k_cw, (D, K), dtype=jnp.float32, minval=-std1, maxval=std1)
    gamma = jnp.zeros((1,), dtype=jnp.float32)

    x = jax.random.normal(k_x, (B, D, H, W), dtype=jnp.float32)

    # Module's default gamma (=0) -> output == input
    out = dict_encoding_forward(x, codewords, gamma)
    jax.block_until_ready(out)
    ref = _reference(x, codewords, gamma)
    assert jnp.allclose(out, ref, atol=1e-5, rtol=1e-5)

    # Non-trivial path with a nonzero gamma (full-precision MXU path)
    gamma_nz = jnp.full((1,), 0.5, dtype=jnp.float32)
    out_nz = dict_encoding_forward(x, codewords, gamma_nz)
    jax.block_until_ready(out_nz)
    ref_nz = _reference(x, codewords, gamma_nz)
    assert jnp.allclose(out_nz, ref_nz, atol=1e-5, rtol=1e-5)

    # bf16 MXU operand path (recommended on v6e/v7x): looser tolerance.
    out_bf16 = dict_encoding_forward(x, codewords, gamma_nz,
                                     mxu_dtype=jnp.bfloat16)
    jax.block_until_ready(out_bf16)
    assert jnp.allclose(out_bf16, ref_nz, atol=1e-2, rtol=1e-2)

    print("KERNEL_OK")
</pallas_src>

<mosaic_0001>
module attributes {stable_mosaic.version = 11 : i64} {
  func.func @_dict_encoding_kernel(%arg0: i32, %arg1: i32, %arg2: memref<1x32x256xf32, #tpu.memory_space<vmem>>, %arg3: memref<32x16xf32, #tpu.memory_space<vmem>>, %arg4: memref<16x32xf32, #tpu.memory_space<vmem>>, %arg5: memref<1xf32, #tpu.memory_space<smem>>, %arg6: memref<1x32x256xf32, #tpu.memory_space<vmem>>) attributes {dimension_semantics = [#tpu.dimension_semantics<parallel>, #tpu.dimension_semantics<parallel>], iteration_bounds = array<i64: 2, 1>, scalar_prefetch = 0 : i64, scratch_operands = 0 : i64, tpu.core_type = #tpu.core_type<tc>, window_params = [{transform_indices = @transform_0, window_bounds = array<i64: 1, 32, 256>}, {pipeline_mode = #tpu.pipeline_mode<synchronous>, transform_indices = @transform_1, window_bounds = array<i64: 32, 16>}, {pipeline_mode = #tpu.pipeline_mode<synchronous>, transform_indices = @transform_2, window_bounds = array<i64: 16, 32>}, {transform_indices = @transform_3, window_bounds = array<i64: 1>}, {transform_indices = @transform_4, window_bounds = array<i64: 1, 32, 256>}]} {
    %c0 = arith.constant 0 : index
    %c0_0 = arith.constant 0 : index
    %c0_1 = arith.constant 0 : index
    %0 = vector.load %arg2[%c0, %c0_0, %c0_1] : memref<1x32x256xf32, #tpu.memory_space<vmem>>, vector<1x32x256xf32>
    %1 = vector.shape_cast %0 : vector<1x32x256xf32> to vector<32x256xf32>
    %c0_2 = arith.constant 0 : index
    %2 = memref.load %arg5[%c0_2] : memref<1xf32, #tpu.memory_space<smem>>
    %c0_3 = arith.constant 0 : index
    %c0_4 = arith.constant 0 : index
    %3 = vector.load %arg3[%c0_3, %c0_4] : memref<32x16xf32, #tpu.memory_space<vmem>>, vector<32x16xf32>
    %c0_5 = arith.constant 0 : index
    %c0_6 = arith.constant 0 : index
    %4 = vector.load %arg4[%c0_5, %c0_6] : memref<16x32xf32, #tpu.memory_space<vmem>>, vector<16x32xf32>
    %cst = arith.constant dense<0.000000e+00> : vector<16x256xf32>
    %5 = tpu.matmul %4, %1, %cst {dimension_numbers = #tpu.dot_dimension_numbers<[1], [0], [0], [1], [0, 0, 1, 1], [], []>} : vector<16x32xf32>, vector<32x256xf32>, vector<16x256xf32> -> vector<16x256xf32>
    %cst_7 = arith.constant dense<0xFF800000> : vector<256xf32>
    %6 = vector.multi_reduction <maximumf>, %5, %cst_7 [0] : vector<16x256xf32> to vector<256xf32>
    %7 = vector.shape_cast %6 : vector<256xf32> to vector<1x256xf32>
    %8 = vector.broadcast %7 : vector<1x256xf32> to vector<16x256xf32>
    %9 = arith.subf %5, %8 : vector<16x256xf32>
    %10 = math.exp %9 : vector<16x256xf32>
    %cst_8 = arith.constant dense<0.000000e+00> : vector<256xf32>
    %11 = vector.multi_reduction <add>, %10, %cst_8 [0] : vector<16x256xf32> to vector<256xf32>
    %12 = vector.shape_cast %11 : vector<256xf32> to vector<1x256xf32>
    %13 = tpu.reciprocal %12 : vector<1x256xf32> -> vector<1x256xf32>
    %14 = vector.broadcast %13 : vector<1x256xf32> to vector<16x256xf32>
    %15 = arith.mulf %10, %14 : vector<16x256xf32>
    %cst_9 = arith.constant dense<0.000000e+00> : vector<32x256xf32>
    %16 = tpu.matmul %3, %15, %cst_9 {dimension_numbers = #tpu.dot_dimension_numbers<[1], [0], [0], [1], [0, 0, 1, 1], [], []>} : vector<32x16xf32>, vector<16x256xf32>, vector<32x256xf32> -> vector<32x256xf32>
    %17 = vector.broadcast %2 : f32 to vector<32x256xf32>
    %18 = arith.mulf %17, %16 : vector<32x256xf32>
    %19 = arith.addf %1, %18 : vector<32x256xf32>
    %c0_10 = arith.constant 0 : index
    %c0_11 = arith.constant 0 : index
    %c0_12 = arith.constant 0 : index
    %20 = vector.load %arg6[%c0_10, %c0_11, %c0_12] : memref<1x32x256xf32, #tpu.memory_space<vmem>>, vector<1x32x256xf32>
    %21 = vector.shape_cast %20 : vector<1x32x256xf32> to vector<32x256xf32>
    %22 = vector.shape_cast %19 : vector<32x256xf32> to vector<1x32x256xf32>
    tpu.vector_store %arg6[%c0_10, %c0_11, %c0_12], %22 {strides = array<i32>} : memref<1x32x256xf32, #tpu.memory_space<vmem>>, vector<1x32x256xf32>,
    return
  }
  func.func @transform_0(%arg0: i32, %arg1: i32) -> (i32, i32, i32) {
    %c0_i32 = arith.constant 0 : i32
    %c0_i32_0 = arith.constant 0 : i32
    return %arg0, %c0_i32, %arg1 : i32, i32, i32
  }
  func.func @transform_1(%arg0: i32, %arg1: i32) -> (i32, i32) {
    %c0_i32 = arith.constant 0 : i32
    %c0_i32_0 = arith.constant 0 : i32
    %c0_i32_1 = arith.constant 0 : i32
    return %c0_i32, %c0_i32_0 : i32, i32
  }
  func.func @transform_2(%arg0: i32, %arg1: i32) -> (i32, i32) {
    %c0_i32 = arith.constant 0 : i32
    %c0_i32_0 = arith.constant 0 : i32
    %c0_i32_1 = arith.constant 0 : i32
    return %c0_i32, %c0_i32_0 : i32, i32
  }
  func.func @transform_3(%arg0: i32, %arg1: i32) -> i32 {
    %c0_i32 = arith.constant 0 : i32
    %c0_i32_0 = arith.constant 0 : i32
    return %c0_i32 : i32
  }
  func.func @transform_4(%arg0: i32, %arg1: i32) -> (i32, i32, i32) {
    %c0_i32 = arith.constant 0 : i32
    %c0_i32_0 = arith.constant 0 : i32
    return %arg0, %c0_i32, %arg1 : i32, i32, i32
  }
}

</mosaic_0001>

<llo_original>
// kernel: tpu_custom_call.1
$region0: #{tpu_custom_call.1}
  #allocation0 [shape = 'u32[]', space=smem, size = 0x4, offset = 0x4, fixed_abs, tag = 'smem constant byte address 0x4 - core index']
  #allocation1 [shape = 'u32[72,128]{1,0:T(1,128)}', space=vmem, size = 0x9000, scoped, tag = 'internal scratch']
  #allocation2 [shape = 'f32[1]{0:T(128)S(6)}', space=smem, size = 0x200, scoped, tag = 'scoped memory for tpu_custom_call.1']
  %s0 = inlined_call_operand.hbm [shape: f32[2,32,256], index: 0, kind: input, shape index: {}]
  %s1 = inlined_call_operand.vmem [shape: f32[32,16], index: 1, kind: input, shape index: {}]
  %s2 = inlined_call_operand.vmem [shape: f32[16,32], index: 2, kind: input, shape index: {}]
  %s3 = inlined_call_operand.<no memory space> [shape: f32[1], index: 3, kind: input, shape index: {}]
  %s4 = inlined_call_operand.hbm [shape: f32[2,32,256], index: 4, kind: output, shape index: {}]
  %s5 = sld [smem:[#allocation0]]
  $region53: #{tpu_custom_call.1} parent=0
    _
  %s7 = ssub.s32 1, %s5
  %s8 = scalar_select 0, %s7, %s5
  %9 = sst [smem:[#allocation2]] %s3
  $region1: #{tpu_custom_call.1} parent=0
    #allocation3 [shape = 'u8[65536]{0}', space=vmem, size = 0x10000, scoped, tag = 'input window, operand 0']
    #allocation4 [shape = 's32[2]{0}', space=sflag, size = 0x8, scoped, tag = 'scoped memory for tpu_custom_call.1']
    #allocation5 [shape = 's32[2]{0}', space=sflag, size = 0x8, scoped, tag = 'scoped memory for tpu_custom_call.1']
    #allocation6 [shape = 'u8[65536]{0}', space=vmem, size = 0x10000, scoped, tag = 'output window, operand 0']
    %10 = vsyncpa [#allocation4], 0
    %s11 = scalar_lea.sflag [#allocation4], 1
    %12 = vsyncpa %s11, 0
    %13 = vsyncpa [#allocation5], 0
    %s14 = scalar_lea.sflag [#allocation5], 1
    %15 = vsyncpa %s14, 0
    loop: start=0, step=1, limit=4
    $region2: #{tpu_custom_call.1} parent=1 // loop_pre_header
      _
    $region3: #{tpu_custom_call.1} parent=1 // loop_header
      %s17 = sphi 0, %s21
      %p18 = scmp.ge.s32.totalorder %s17, 4
      %s24 = sphi 0, %s36
      %s25 = sphi 0, %s32
      %s26 = sphi 0, %s24
      %s27 = sphi 0, %s25
      %s28 = sphi 0, %s26
      %s29 = sphi 0, %s27
      %s41 = sphi 0, %s43
      %s44 = sphi 0, %s41
      %s45 = sphi 0, %s44
      %s61 = sphi 0, %s45
      %s65 = sphi 0, %s65
      %s67 = sphi 0, %s65
      %s68 = sphi 0, %s67
      %s82 = sphi 0, %s68
      %s86 = sphi 0, %s86
      %s88 = sphi 0, %s86
      %s89 = sphi 0, %s88
      %s103 = sphi 0, %s89
      %s107 = sphi 0, %s107
      %s109 = sphi 0, %s107
      %s110 = sphi 0, %s109
      %s124 = sphi 0, %s110
      %s132 = sphi 0, %s134
      %s135 = sphi 0, %s132
      %s136 = sphi 0, %s135
      %s152 = sphi 0, %s136
    $region4: #{tpu_custom_call.1} parent=1 // loop_header_branch
      %20 = sbr.rel (%p18) target = $region8
    $region5: #{tpu_custom_call.1} parent=1 // loop_body
      %s22 = ssub.s32 %s17, 1
      %s23 = ssub.s32 %s17, 2
      %s30 = sadd.s32 1, %s25
      %p31 = scmp.ge.s32.totalorder %s30, 1
      %s32 = scalar_select %p31, 0, %s30
      %s33 = sadd.s32 1, %s24
      %s34 = scalar_select %p31, %s33, %s24
      %p35 = scmp.ge.s32.totalorder %s34, 2
      %s36 = scalar_select %p35, 0, %s34
      %s37 = ssub.s32 %s24, %s36
      %s38 = ssub.s32 %s25, %s32
      %s39 = sor.u32 %s37, %s38
      %p40 = scmp.eq.s32.totalorder %s39, 0
      %s42 = sadd.s32 %s41, 1
      %s43 = scalar_select %p40, %s41, %s42
      %p46 = pneg %p40
      %p47 = scmp.eq.s32.totalorder %s17, 1
      %p48 = por %p46, %p47
      %p49 = scmp.ne.s32.totalorder %s41, %s44
      %p50 = scmp.eq.s32.totalorder %s17, 0
      %p51 = por %p49, %p50
      %p52 = scmp.ne.s32.totalorder %s41, %s44
      %p53 = scmp.eq.s32.totalorder %s22, 1
      %p54 = por %p52, %p53
      %p55 = scmp.ne.s32.totalorder %s44, %s45
      %p56 = scmp.eq.s32.totalorder %s22, 0
      %p57 = por %p55, %p56
      %p58 = scmp.ne.s32.totalorder %s44, %s45
      %p59 = scmp.eq.s32.totalorder %s23, 1
      %p60 = por %p58, %p59
      %p62 = scmp.ne.s32.totalorder %s45, %s61
      %p63 = scmp.eq.s32.totalorder %s23, 0
      %p64 = por %p62, %p63
      %s66 = sadd.s32 %s65, 1
      %p69 = scmp.eq.s32.totalorder %s17, 1
      %p70 = scmp.ne.s32.totalorder %s65, %s67
      %p71 = scmp.eq.s32.totalorder %s17, 0
      %p72 = por %p70, %p71
      %p73 = scmp.ne.s32.totalorder %s65, %s67
      %p74 = scmp.eq.s32.totalorder %s22, 1
      %p75 = por %p73, %p74
      %p76 = scmp.ne.s32.totalorder %s67, %s68
      %p77 = scmp.eq.s32.totalorder %s22, 0
      %p78 = por %p76, %p77
      %p79 = scmp.ne.s32.totalorder %s67, %s68
      %p80 = scmp.eq.s32.totalorder %s23, 1
      %p81 = por %p79, %p80
      %p83 = scmp.ne.s32.totalorder %s68, %s82
      %p84 = scmp.eq.s32.totalorder %s23, 0
      %p85 = por %p83, %p84
      %s87 = sadd.s32 %s86, 1
      %p90 = scmp.eq.s32.totalorder %s17, 1
      %p91 = scmp.ne.s32.totalorder %s86, %s88
      %p92 = scmp.eq.s32.totalorder %s17, 0
      %p93 = por %p91, %p92
      %p94 = scmp.ne.s32.totalorder %s86, %s88
      %p95 = scmp.eq.s32.totalorder %s22, 1
      %p96 = por %p94, %p95
      %p97 = scmp.ne.s32.totalorder %s88, %s89
      %p98 = scmp.eq.s32.totalorder %s22, 0
      %p99 = por %p97, %p98
      %p100 = scmp.ne.s32.totalorder %s88, %s89
      %p101 = scmp.eq.s32.totalorder %s23, 1
      %p102 = por %p100, %p101
      %p104 = scmp.ne.s32.totalorder %s89, %s103
      %p105 = scmp.eq.s32.totalorder %s23, 0
      %p106 = por %p104, %p105
      %s108 = sadd.s32 %s107, 1
      %p111 = scmp.eq.s32.totalorder %s17, 1
      %p112 = scmp.ne.s32.totalorder %s107, %s109
      %p113 = scmp.eq.s32.totalorder %s17, 0
      %p114 = por %p112, %p113
      %p115 = scmp.ne.s32.totalorder %s107, %s109
      %p116 = scmp.eq.s32.totalorder %s22, 1
      %p117 = por %p115, %p116
      %p118 = scmp.ne.s32.totalorder %s109, %s110
      %p119 = scmp.eq.s32.totalorder %s22, 0
      %p120 = por %p118, %p119
      %p121 = scmp.ne.s32.totalorder %s109, %s110
      %p122 = scmp.eq.s32.totalorder %s23, 1
      %p123 = por %p121, %p122
      %p125 = scmp.ne.s32.totalorder %s110, %s124
      %p126 = scmp.eq.s32.totalorder %s23, 0
      %p127 = por %p125, %p126
      %s128 = ssub.s32 %s24, %s36
      %s129 = ssub.s32 %s25, %s32
      %s130 = sor.u32 %s128, %s129
      %p131 = scmp.eq.s32.totalorder %s130, 0
      %s133 = sadd.s32 %s132, 1
      %s134 = scalar_select %p131, %s132, %s133
      %p137 = pneg %p131
      %p138 = scmp.eq.s32.totalorder %s17, 1
      %p139 = por %p137, %p138
      %p140 = scmp.ne.s32.totalorder %s132, %s135
      %p141 = scmp.eq.s32.totalorder %s17, 0
      %p142 = por %p140, %p141
      %p143 = scmp.ne.s32.totalorder %s132, %s135
      %p144 = scmp.eq.s32.totalorder %s22, 1
      %p145 = por %p143, %p144
      %p146 = scmp.ne.s32.totalorder %s135, %s136
      %p147 = scmp.eq.s32.totalorder %s22, 0
      %p148 = por %p146, %p147
      %p149 = scmp.ne.s32.totalorder %s135, %s136
      %p150 = scmp.eq.s32.totalorder %s23, 1
      %p151 = por %p149, %p150
      %p153 = scmp.ne.s32.totalorder %s136, %s152
      %p154 = scmp.eq.s32.totalorder %s23, 0
      %p155 = por %p153, %p154
      %p156 = scmp.le.s32.totalorder 1, %s17
      %p157 = scmp.lt.s32.totalorder %s17, 3
      %p158 = pnand %p156, %p157
      %p159 = pneg %p158
      // Predicated region
      $region9: #{tpu_custom_call.1} parent=5 // pred_check
        _
      $region10: #{tpu_custom_call.1} parent=5 // pred_check_branch
        %161 = sbr.rel (%p158) target = $region12
      $region11: #{tpu_custom_call.1} parent=5 // pred_region
        %s162 = ssub.s32 %s17, 1
        // Predicated region
        $region13: #{tpu_custom_call.1} parent=11 // pred_check
          %p163 = pneg %p78
        $region14: #{tpu_custom_call.1} parent=11 // pred_check_branch
          %165 = sbr.rel (%p163) target = $region16
        $region15: #{tpu_custom_call.1} parent=11 // pred_region
          _
        $region16: #{tpu_custom_call.1} parent=11 // pred_fallthru
          _
        // Predicated region
        $region17: #{tpu_custom_call.1} parent=11 // pred_check
          %p166 = pneg %p99
        $region18: #{tpu_custom_call.1} parent=11 // pred_check_branch
          %168 = sbr.rel (%p166) target = $region20
        $region19: #{tpu_custom_call.1} parent=11 // pred_region
          _
        $region20: #{tpu_custom_call.1} parent=11 // pred_fallthru
          _
        // Predicated region
        $region21: #{tpu_custom_call.1} parent=11 // pred_check
          %p169 = pneg %p120
        $region22: #{tpu_custom_call.1} parent=11 // pred_check_branch
          %171 = sbr.rel (%p169) target = $region24
        $region23: #{tpu_custom_call.1} parent=11 // pred_region
          _
        $region24: #{tpu_custom_call.1} parent=11 // pred_fallthru
          _
      $region12: #{tpu_custom_call.1} parent=5 // pred_fallthru
        _
      %p172 = scmp.lt.s32.totalorder %s17, 2
      // Predicated region
      $region25: #{tpu_custom_call.1} parent=5 // pred_check
        %p173 = pneg %p172
      $region26: #{tpu_custom_call.1} parent=5 // pred_check_branch
        %175 = sbr.rel (%p173) target = $region28
      $region27: #{tpu_custom_call.1} parent=5 // pred_region
        // Predicated region
        $region29: #{tpu_custom_call.1} parent=27 // pred_check
          %p176 = pneg %p51
        $region30: #{tpu_custom_call.1} parent=27 // pred_check_branch
          %178 = sbr.rel (%p176) target = $region32
        $region31: #{tpu_custom_call.1} parent=27 // pred_region
          %s179 = sand.u32 %s41, 1
          %s180 = scalar_lea.sflag [#allocation4], %s179
          %s181 = sand.u32 %s41, 1
          %s182 = smul.addr %s181, 64
          %s183 = scalar_lea.vmem [#allocation3], %s182
          %s184 = smul.u32 2, %s25
          %186 = vsyncadd %s180, 0
          %s187 = smul.addr %s24, 8
          %s188 = sadd.s32 %s184, %s187
          %s189 = smul.addr %s188, 8
          %s190 = scalar_lea.hbm %s0, %s189
          %s191 = sshll.u32 %s190, 4
          %s192 = int_to_ptr.hbm [resolvable:$true] %s191
          %s193 = sshll.u32 %s183, 4
          %s194 = int_to_ptr.vmem [resolvable:$true] %s193
          %199 = dma.hbm_to_vmem [thread:$0]  %s192, 1024, %s194, %s180, 256, 256, 16
        $region32: #{tpu_custom_call.1} parent=27 // pred_fallthru
          _
      $region28: #{tpu_custom_call.1} parent=5 // pred_fallthru
        _
      %p200 = scmp.le.s32.totalorder 1, %s17
      %p201 = scmp.lt.s32.totalorder %s17, 3
      %p202 = pnand %p200, %p201
      %p203 = pneg %p202
      // Predicated region
      $region33: #{tpu_custom_call.1} parent=5 // pred_check
        _
      $region34: #{tpu_custom_call.1} parent=5 // pred_check_branch
        %205 = sbr.rel (%p202) target = $region36
      $region35: #{tpu_custom_call.1} parent=5 // pred_region
        %s206 = ssub.s32 %s17, 1
        %s207 = sand.u32 %s44, 1
        %s208 = scalar_lea.sflag [#allocation4], %s207
        %s209 = sand.u32 %s44, 1
        %s210 = smul.addr %s209, 64
        %s211 = scalar_lea.vmem [#allocation3], %s210
        // Predicated region
        $region37: #{tpu_custom_call.1} parent=35 // pred_check
          %p212 = pneg %p57
        $region38: #{tpu_custom_call.1} parent=35 // pred_check_branch
          %214 = sbr.rel (%p212) target = $region40
        $region39: #{tpu_custom_call.1} parent=35 // pred_region
          %216 = dma.done %s208, 1024
        $region40: #{tpu_custom_call.1} parent=35 // pred_fallthru
          _
        %s217 = sand.u32 %s44, 1
        %s218 = scalar_lea.sflag [#allocation4], %s217
        %s219 = sand.u32 %s44, 1
        %s220 = smul.addr %s219, 64
        %s221 = scalar_lea.vmem [#allocation3], %s220
        %p222 = pneg %p57
        %p223 = pneg %p54
        %p224 = pneg %p78
        %p225 = pneg %p75
        %p226 = pneg %p99
        %p227 = pneg %p96
        %p228 = pneg %p120
        %p229 = pneg %p117
        %p230 = pneg %p148
        %p231 = pneg %p145
        %s232 = sand.u32 %s135, 1
        %s233 = scalar_lea.sflag [#allocation5], %s232
        %s234 = sand.u32 %s135, 1
        %s235 = smul.addr %s234, 64
        %s236 = scalar_lea.vmem [#allocation6], %s235
        %s237 = smul.u32 2, %s27
        %s238 = smul.u32 2, %s27
        %v239 = vld [vmem:[%s211] sm:$0xff]
        %v240 = vld [vmem:[%s211 + $0x8] sm:$0xff]
        %v241 = vld [vmem:[%s211 + $0x10] sm:$0xff]
        %v242 = vld [vmem:[%s211 + $0x18] sm:$0xff]
        %v243 = vld [vmem:[%s211 + $0x20] sm:$0xff]
        %v244 = vld [vmem:[%s211 + $0x28] sm:$0xff]
        %v245 = vld [vmem:[%s211 + $0x30] sm:$0xff]
        %v246 = vld [vmem:[%s211 + $0x38] sm:$0xff]
        %s247 = sld [smem:[#allocation2]]
        %v248 = vld [vmem:[%s1] sm:$0xff]
        %v249 = vld [vmem:[%s1 + $0x8] sm:$0xff]
        %v250 = vld [vmem:[%s1 + $0x10] sm:$0xff]
        %v251 = vld [vmem:[%s1 + $0x18] sm:$0xff]
        %v252 = vld [vmem:[%s2] sm:$0xff]
        %v253 = vld [vmem:[%s2 + $0x8] sm:$0xff]
        %vm254 = vcmask 261120
        %v256 = vsel %vm254, %v252, 0
        %v259 = vsel %vm254, %v253, 0
        %261 = vmatpush.msra.mxu0 0.0
        %262 = vmatpush.msra.mxu0 0.0
        %263 = vmatpush.msra.mxu0 0.0
        %264 = vmatpush.msra.mxu0 0.0
        %265 = vmatpush.msra.mxu0 0.0
        %266 = vmatpush.msra.mxu0 0.0
        %267 = vmatpush.msra.mxu0 0.0
        %268 = vmatpush.msra.mxu0 0.0
        %269 = vmatpush.msra.mxu0 0.0
        %270 = vmatpush.msra.mxu0 0.0
        %271 = vmatpush.msra.mxu0 0.0
        %272 = vmatpush.msra.mxu0 0.0
        %273 = vmatpush.msra.mxu0 %v245
        %274 = vmatpush.msra.mxu0 %v243
        %275 = vmatpush.msra.mxu0 %v241
        %276 = vmatpush.msra.mxu0 %v239
        %277 = vmatmul.f32.gmra.mxu0 %v256
        %v278 = vpop.f32.mrf.mxu0
        %v279 = vadd.f32 0.0, %v278
        %280 = vmatmul.f32.gmra.mxu0 %v259
        %v281 = vpop.f32.mrf.mxu0
        %v282 = vadd.f32 0.0, %v281
        %283 = vdwg.mxu0
        %284 = vmatpush.msra.mxu0 0.0
        %285 = vmatpush.msra.mxu0 0.0
        %286 = vmatpush.msra.mxu0 0.0
        %287 = vmatpush.msra.mxu0 0.0
        %288 = vmatpush.msra.mxu0 0.0
        %289 = vmatpush.msra.mxu0 0.0
        %290 = vmatpush.msra.mxu0 0.0
        %291 = vmatpush.msra.mxu0 0.0
        %292 = vmatpush.msra.mxu0 0.0
        %293 = vmatpush.msra.mxu0 0.0
        %294 = vmatpush.msra.mxu0 0.0
        %295 = vmatpush.msra.mxu0 0.0
        %296 = vmatpush.msra.mxu0 %v246
        %297 = vmatpush.msra.mxu0 %v244
        %298 = vmatpush.msra.mxu0 %v242
        %299 = vmatpush.msra.mxu0 %v240
        %300 = vmatmul.f32.gmra.mxu0 %v256
        %v301 = vpop.f32.mrf.mxu0
        %v302 = vadd.f32 0.0, %v301
        %303 = vmatmul.f32.gmra.mxu0 %v259
        %v304 = vpop.f32.mrf.mxu0
        %v305 = vadd.f32 0.0, %v304
        %306 = vdwg.mxu0
        %v307 = vmax.f32 %v279, %v282
        %v308 = vrot.slane %v307, 4
        %v309 = vmax.f32 %v307, %v308
        %v310 = vrot.slane %v309, 2
        %v311 = vmax.f32 %v309, %v310
        %v312 = vrot.slane %v311, 1
        %v313 = vmax.f32 %v311, %v312
        %v314 = vmax.f32 %v302, %v305
        %v315 = vrot.slane %v314, 4
        %v316 = vmax.f32 %v314, %v315
        %v317 = vrot.slane %v316, 2
        %v318 = vmax.f32 %v316, %v317
        %v319 = vrot.slane %v318, 1
        %v320 = vmax.f32 %v318, %v319
        %v321 = vsub.f32 %v279, %v313
        %v322 = vsub.f32 %v302, %v320
        %v323 = vsub.f32 %v282, %v313
        %v324 = vsub.f32 %v305, %v320
        %v325 = vmul.f32 %v321, 1.442695
        %v326 = vpow.pop %v325
        %v327 = vmul.f32 %v322, 1.442695
        %v328 = vpow.pop %v327
        %v329 = vmul.f32 %v323, 1.442695
        %v330 = vpow.pop %v329
        %v331 = vmul.f32 %v324, 1.442695
        %v332 = vpow.pop %v331
        %v333 = vadd.f32 %v326, %v330
        %v334 = vrot.slane %v333, 4
        %v335 = vadd.f32 %v333, %v334
        %v336 = vrot.slane %v335, 2
        %v337 = vadd.f32 %v335, %v336
        %v338 = vrot.slane %v337, 1
        %v339 = vadd.f32 %v337, %v338
        %v340 = vadd.f32 %v328, %v332
        %v341 = vrot.slane %v340, 4
        %v342 = vadd.f32 %v340, %v341
        %v343 = vrot.slane %v342, 2
        %v344 = vadd.f32 %v342, %v343
        %v345 = vrot.slane %v344, 1
        %v346 = vadd.f32 %v344, %v345
        %v347 = vrcp.pop %v339
        %v348 = vmul.f32 %v339, %v347
        %v349 = vsub.f32 1.0, %v348
        %v350 = vmul.f32 %v347, %v349
        %v351 = vadd.f32 %v347, %v350
        %vm352 = vweird.f32 %v339
        %vm353 = vweird.f32 %v347
        %vm354 = vmor %vm352, %vm353
        %v355 = vsel %vm354, %v347, %v351
        %v356 = vand.u32 2147483647, %v339
        %vm357 = vcmp.eq.f32.partialorder %v356, 8.507059e+37
        %v358 = vand.u32 %v339, 2147483648
        %v359 = vor.u32 1.1754944e-38, %v358
        %v360 = vsel %vm357, %v359, %v355
        %v361 = vrcp.pop %v346
        %v362 = vmul.f32 %v346, %v361
        %v363 = vsub.f32 1.0, %v362
        %v364 = vmul.f32 %v361, %v363
        %v365 = vadd.f32 %v361, %v364
        %vm366 = vweird.f32 %v346
        %vm367 = vweird.f32 %v361
        %vm368 = vmor %vm366, %vm367
        %v369 = vsel %vm368, %v361, %v365
        %v370 = vand.u32 2147483647, %v346
        %vm371 = vcmp.eq.f32.partialorder %v370, 8.507059e+37
        %v372 = vand.u32 %v346, 2147483648
        %v373 = vor.u32 1.1754944e-38, %v372
        %v374 = vsel %vm371, %v373, %v369
        %v375 = vmul.f32 %v326, %v360
        %v376 = vmul.f32 %v328, %v374
        %v377 = vmul.f32 %v330, %v360
        %v378 = vmul.f32 %v332, %v374
        %vm379 = vcmask 130048
        %v381 = vsel %vm379, %v248, 0
        %v384 = vsel %vm379, %v249, 0
        %v387 = vsel %vm379, %v250, 0
        %v390 = vsel %vm379, %v251, 0
        %392 = vmatpush.msra.mxu0 0.0
        %393 = vmatpush.msra.mxu0 0.0
        %394 = vmatpush.msra.mxu0 0.0
        %395 = vmatpush.msra.mxu0 0.0
        %396 = vmatpush.msra.mxu0 0.0
        %397 = vmatpush.msra.mxu0 0.0
        %398 = vmatpush.msra.mxu0 0.0
        %399 = vmatpush.msra.mxu0 0.0
        %400 = vmatpush.msra.mxu0 0.0
        %401 = vmatpush.msra.mxu0 0.0
        %402 = vmatpush.msra.mxu0 0.0
        %403 = vmatpush.msra.mxu0 0.0
        %404 = vmatpush.msra.mxu0 0.0
        %405 = vmatpush.msra.mxu0 0.0
        %406 = vmatpush.msra.mxu0 %v377
        %407 = vmatpush.msra.mxu0 %v375
        %408 = vmatmul.f32.gmra.mxu0 %v381
        %v409 = vpop.f32.mrf.mxu0
        %v410 = vadd.f32 0.0, %v409
        %411 = vmatmul.f32.gmra.mxu0 %v384
        %v412 = vpop.f32.mrf.mxu0
        %v413 = vadd.f32 0.0, %v412
        %414 = vmatmul.f32.gmra.mxu0 %v387
        %v415 = vpop.f32.mrf.mxu0
        %v416 = vadd.f32 0.0, %v415
        %417 = vmatmul.f32.gmra.mxu0 %v390
        %v418 = vpop.f32.mrf.mxu0
        %v419 = vadd.f32 0.0, %v418
        %420 = vdwg.mxu0
        %421 = vmatpush.msra.mxu0 0.0
        %422 = vmatpush.msra.mxu0 0.0
        %423 = vmatpush.msra.mxu0 0.0
        %424 = vmatpush.msra.mxu0 0.0
        %425 = vmatpush.msra.mxu0 0.0
        %426 = vmatpush.msra.mxu0 0.0
        %427 = vmatpush.msra.mxu0 0.0
        %428 = vmatpush.msra.mxu0 0.0
        %429 = vmatpush.msra.mxu0 0.0
        %430 = vmatpush.msra.mxu0 0.0
        %431 = vmatpush.msra.mxu0 0.0
        %432 = vmatpush.msra.mxu0 0.0
        %433 = vmatpush.msra.mxu0 0.0
        %434 = vmatpush.msra.mxu0 0.0
        %435 = vmatpush.msra.mxu0 %v378
        %436 = vmatpush.msra.mxu0 %v376
        %437 = vmatmul.f32.gmra.mxu0 %v381
        %v438 = vpop.f32.mrf.mxu0
        %v439 = vadd.f32 0.0, %v438
        %440 = vmatmul.f32.gmra.mxu0 %v384
        %v441 = vpop.f32.mrf.mxu0
        %v442 = vadd.f32 0.0, %v441
        %443 = vmatmul.f32.gmra.mxu0 %v387
        %v444 = vpop.f32.mrf.mxu0
        %v445 = vadd.f32 0.0, %v444
        %446 = vmatmul.f32.gmra.mxu0 %v390
        %v447 = vpop.f32.mrf.mxu0
        %v448 = vadd.f32 0.0, %v447
        %449 = vdwg.mxu0
        %v450 = vstv %s247
        %v451 = vmul.f32 %v450, %v410
        %v452 = vmul.f32 %v450, %v439
        %v453 = vmul.f32 %v450, %v413
        %v454 = vmul.f32 %v450, %v442
        %v455 = vmul.f32 %v450, %v416
        %v456 = vmul.f32 %v450, %v445
        %v457 = vmul.f32 %v450, %v419
        %v458 = vmul.f32 %v450, %v448
        %v459 = vadd.f32 %v239, %v451
        %v460 = vadd.f32 %v240, %v452
        %v461 = vadd.f32 %v241, %v453
        %v462 = vadd.f32 %v242, %v454
        %v463 = vadd.f32 %v243, %v455
        %v464 = vadd.f32 %v244, %v456
        %v465 = vadd.f32 %v245, %v457
        %v466 = vadd.f32 %v246, %v458
        %467 = vst [vmem:[%s236] sm:$0xff] %v459
        %468 = vst [vmem:[%s236 + $0x8] sm:$0xff] %v460
        %469 = vst [vmem:[%s236 + $0x10] sm:$0xff] %v461
        %470 = vst [vmem:[%s236 + $0x18] sm:$0xff] %v462
        %471 = vst [vmem:[%s236 + $0x20] sm:$0xff] %v463
        %472 = vst [vmem:[%s236 + $0x28] sm:$0xff] %v464
        %473 = vst [vmem:[%s236 + $0x30] sm:$0xff] %v465
        %474 = vst [vmem:[%s236 + $0x38] sm:$0xff] %v466
        %s475 = sand.u32 %s135, 1
        %s476 = scalar_lea.sflag [#allocation5], %s475
        %s477 = sand.u32 %s135, 1
        %s478 = smul.addr %s477, 64
        %s479 = scalar_lea.vmem [#allocation6], %s478
        // Predicated region
        $region41: #{tpu_custom_call.1} parent=35 // pred_check
          %p480 = pneg %p145
        $region42: #{tpu_custom_call.1} parent=35 // pred_check_branch
          %482 = sbr.rel (%p480) target = $region44
        $region43: #{tpu_custom_call.1} parent=35 // pred_region
          %s483 = smul.u32 2, %s27
          %485 = vsyncadd %s476, 0
          %s486 = smul.addr %s26, 8
          %s487 = sadd.s32 %s483, %s486
          %s488 = smul.addr %s487, 8
          %s489 = scalar_lea.hbm %s4, %s488
          %s490 = sshll.u32 %s479, 4
          %s491 = int_to_ptr.vmem [resolvable:$true] %s490
          %s492 = sshll.u32 %s489, 4
          %s493 = int_to_ptr.hbm [resolvable:$true] %s492
          %498 = dma.vmem_to_hbm [thread:$0]  %s491, 1024, %s493, %s476, 256, 256, 16
        $region44: #{tpu_custom_call.1} parent=35 // pred_fallthru
          _
      $region36: #{tpu_custom_call.1} parent=5 // pred_fallthru
        _
      %p499 = scmp.le.s32.totalorder 2, %s17
      // Predicated region
      $region45: #{tpu_custom_call.1} parent=5 // pred_check
        %p500 = pneg %p499
      $region46: #{tpu_custom_call.1} parent=5 // pred_check_branch
        %502 = sbr.rel (%p500) target = $region48
      $region47: #{tpu_custom_call.1} parent=5 // pred_region
        %s503 = ssub.s32 %s17, 2
        // Predicated region
        $region49: #{tpu_custom_call.1} parent=47 // pred_check
          %p504 = pneg %p151
        $region50: #{tpu_custom_call.1} parent=47 // pred_check_branch
          %506 = sbr.rel (%p504) target = $region52
        $region51: #{tpu_custom_call.1} parent=47 // pred_region
          %s507 = sand.u32 %s136, 1
          %s508 = scalar_lea.sflag [#allocation5], %s507
          %s509 = sand.u32 %s136, 1
          %s510 = smul.addr %s509, 64
          %s511 = scalar_lea.vmem [#allocation6], %s510
          %513 = dma.done %s508, 1024
        $region52: #{tpu_custom_call.1} parent=47 // pred_fallthru
          _
      $region48: #{tpu_custom_call.1} parent=5 // pred_fallthru
        _
    $region6: #{tpu_custom_call.1} parent=1 // loop_footer
      %s21 = sadd.s32 1, %s17
    $region7: #{tpu_custom_call.1} parent=1 // loop_footer_branch
      %16 = sbr.rel target = $region3
    $region8: #{tpu_custom_call.1} parent=1 // loop_exit
      _
    %514 = vsyncpa [#allocation4], 1
    %s515 = scalar_lea.sflag [#allocation4], 1
    %516 = vsyncpa %s515, 1
    %517 = vsyncpa [#allocation5], 1
    %s518 = scalar_lea.sflag [#allocation5], 1
    %519 = vsyncpa %s518, 1

</llo_original>
